<compile_context>
chip_gen: v7x
topology: tpu7x:2x2x1
jax: 0.10.0
libtpu: 0.0.40
codegen_flags: <defaults>
</compile_context>

<pallas_src>
import jax
import jax.numpy as jnp
from jax.experimental import pallas as pl
from jax.experimental.pallas import tpu as pltpu


def _round_up(a, b):
    return (a + b - 1) // b * b


def _pick_tile(desired, total, unit):
    """Largest multiple of `unit` <= desired that divides round_up(total, unit)."""
    total_pad = _round_up(max(total, 1), unit)
    t = min(_round_up(desired, unit), total_pad)
    while total_pad % t:
        t -= unit
    return t, total_pad


def _vmem_limit(footprint_bytes):
    # 2x headroom for compiler scratch, clamped to a safe physical-ish range.
    return int(min(max(2 * footprint_bytes, 8 * 1024 * 1024), 64 * 1024 * 1024))


# --------------------------------------------------------------------------
# kernels
# --------------------------------------------------------------------------

def _adapt_kernel(x_ref, aw_ref, e_ref):
    # x_ref:  (TM, H)  bf16 rows of flattened input
    # aw_ref: (H, TP)  bf16 adapt weight, pre-transposed (hidden, embed tile)
    # e_ref:  (TM, TP) bf16 embed activations (cast once here, reused for
    #                  every vocab tile by the second kernel)
    e_ref[...] = jnp.dot(
        x_ref[...], aw_ref[...],
        preferred_element_type=jnp.float32).astype(e_ref.dtype)


def _logits_kernel(e_ref, tw_ref, tb_ref, y_ref):
    # e_ref:  (TM, P)   bf16 embed activations
    # tw_ref: (P, TN)   bf16 token table, pre-transposed (embed, vocab tile)
    # tb_ref: (1, TN)   f32 bias tile
    # y_ref:  (TM, TN)  logits out (lane-dense, unmasked stores)
    y = jnp.dot(e_ref[...], tw_ref[...], preferred_element_type=jnp.float32)
    y_ref[...] = (y + tb_ref[...]).astype(y_ref.dtype)


# --------------------------------------------------------------------------
# wrapper
# --------------------------------------------------------------------------

def prepare_deduce_weights(adapt_w, table_w, table_b,
                           compute_dtype=jnp.bfloat16):
    """One-time weight layout prep: [K, N] bf16, vocab padded to 128.

    Cache the result (or jit the whole step) so the full-table transpose /
    cast / pad does not run on every forward call.
    """
    N, P = table_w.shape
    n_pad = _round_up(N, 128)
    tw_t = table_w.T.astype(compute_dtype)              # (P, N)
    tb2 = table_b.reshape(1, N).astype(jnp.float32)     # (1, N)
    if n_pad != N:
        tw_t = jnp.pad(tw_t, ((0, 0), (0, n_pad - N)))
        tb2 = jnp.pad(tb2, ((0, 0), (0, n_pad - N)))
    aw_t = None if adapt_w is None else adapt_w.T.astype(compute_dtype)  # (H, P)
    return dict(aw_t=aw_t, tw_t=tw_t, tb2=tb2, num_toks=N)


def deduce_forward_prepared(x, tgt, prepared, *,
                            tm=512, tn=512,
                            compute_dtype=jnp.bfloat16,
                            out_dtype=jnp.float32):
    """x: [B, S, H], tgt: [B, S] (unused — the module's xent is dead work).

    Returns logits y: [B, S, num_toks] in out_dtype.
    """
    del tgt  # sparse-softmax-xent in the original forward is discarded.

    aw_t = prepared["aw_t"]
    tw_t = prepared["tw_t"]
    tb2 = prepared["tb2"]
    N = prepared["num_toks"]

    B, S, H = x.shape
    P, n_pad = tw_t.shape
    rows = B * S
    cbytes = jnp.dtype(compute_dtype).itemsize
    obytes = jnp.dtype(out_dtype).itemsize

    tm_eff, rows_pad = _pick_tile(tm, rows, 16)     # bf16 sublane packing
    tn_eff, _ = _pick_tile(tn, n_pad, 128)          # lane-dense vocab tiles

    x2 = x.reshape(rows, H).astype(compute_dtype)
    if rows_pad != rows:
        x2 = jnp.pad(x2, ((0, rows_pad - rows), (0, 0)))

    # ---- stage 1: hidden -> embed projection (only if adapt_w exists) -----
    if aw_t is not None:
        assert aw_t.shape == (H, P)
        if P % 128 == 0:
            tp_eff, _ = _pick_tile(512, P, 128)
        else:
            tp_eff = P                               # small / odd embed dim
        a_grid = (rows_pad // tm_eff, P // tp_eff)
        a_foot = 2 * (tm_eff * H * cbytes
                      + H * tp_eff * cbytes
                      + tm_eff * tp_eff * cbytes)
        e = pl.pallas_call(
            _adapt_kernel,
            out_shape=jax.ShapeDtypeStruct((rows_pad, P), compute_dtype),
            grid_spec=pltpu.PrefetchScalarGridSpec(
                num_scalar_prefetch=0,
                grid=a_grid,
                in_specs=[
                    pl.BlockSpec((tm_eff, H), lambda i, j: (i, 0)),    # x rows
                    pl.BlockSpec((H, tp_eff), lambda i, j: (0, j)),    # adapt_w^T
                ],
                out_specs=pl.BlockSpec((tm_eff, tp_eff), lambda i, j: (i, j)),
            ),
            compiler_params=pltpu.CompilerParams(
                dimension_semantics=("parallel", "parallel"),
                vmem_limit_bytes=_vmem_limit(a_foot)),
            cost_estimate=pl.CostEstimate(
                flops=2 * rows_pad * H * P,
                transcendentals=0,
                bytes_accessed=(rows_pad * H * cbytes
                                + H * P * cbytes
                                + rows_pad * P * cbytes)),
        )(x2, aw_t)
    else:
        assert P == H
        e = x2                                        # already bf16

    # ---- stage 2: embed -> vocab logits ------------------------------------
    v_grid = (rows_pad // tm_eff, n_pad // tn_eff)
    v_foot = 2 * (tm_eff * P * cbytes
                  + P * tn_eff * cbytes
                  + tn_eff * 4
                  + tm_eff * tn_eff * obytes)
    y_flat = pl.pallas_call(
        _logits_kernel,
        out_shape=jax.ShapeDtypeStruct((rows_pad, n_pad), out_dtype),
        grid_spec=pltpu.PrefetchScalarGridSpec(
            num_scalar_prefetch=0,
            grid=v_grid,
            in_specs=[
                pl.BlockSpec((tm_eff, P), lambda i, j: (i, 0)),        # e rows
                pl.BlockSpec((P, tn_eff), lambda i, j: (0, j)),        # table_w^T
                pl.BlockSpec((1, tn_eff), lambda i, j: (0, j)),        # bias tile
            ],
            out_specs=pl.BlockSpec((tm_eff, tn_eff), lambda i, j: (i, j)),
        ),
        compiler_params=pltpu.CompilerParams(
            dimension_semantics=("parallel", "parallel"),
            vmem_limit_bytes=_vmem_limit(v_foot)),
        cost_estimate=pl.CostEstimate(
            flops=2 * rows_pad * P * n_pad,
            transcendentals=0,
            bytes_accessed=(rows_pad * P * cbytes
                            + P * n_pad * cbytes
                            + n_pad * 4
                            + rows_pad * n_pad * obytes)),
    )(e, tw_t, tb2)

    # Only slice (and pay the copy) when padding was actually added.
    if rows_pad != rows or n_pad != N:
        y_flat = y_flat[:rows, :N]
    return y_flat.reshape(B, S, N)


def deduce_forward(x, tgt, adapt_w, table_w, table_b, *,
                   tm=512, tn=512,
                   compute_dtype=jnp.bfloat16,
                   out_dtype=jnp.float32):
    """Convenience wrapper: preps weights inline. For production, call
    prepare_deduce_weights once and reuse (or jit the whole step)."""
    prepared = prepare_deduce_weights(adapt_w, table_w, table_b, compute_dtype)
    return deduce_forward_prepared(x, tgt, prepared, tm=tm, tn=tn,
                                   compute_dtype=compute_dtype,
                                   out_dtype=out_dtype)


def _reference(x, adapt_w, table_w, table_b):
    # Mirrors Deduce.logits (brackets=None) in full f32.
    y = x
    if adapt_w is not None:
        y = jnp.einsum('bih,ph->bip', y, adapt_w)
    y = jnp.einsum('bie,ne->bin', y, table_w) + table_b
    return y


if __name__ == "__main__":
    # Config implied by Deduce.build (brackets=None, share_* off):
    #   dim_hidden=32, dim_embed=16 (!= hidden -> adapt_w exists), num_toks=128
    B, S, H, P, N = 2, 8, 32, 16, 128

    key = jax.random.PRNGKey(0)
    kx, kt, ka, kw, kb = jax.random.split(key, 5)

    x = jax.random.normal(kx, (B, S, H), dtype=jnp.float32)
    tgt = jax.random.randint(kt, (B, S), 0, N, dtype=jnp.int32)

    # deterministic synthetic parameters (shapes from Deduce.build):
    adapt_w = 0.05 * jax.random.normal(ka, (P, H), dtype=jnp.float32)  # adapt_w0
    table_w = 0.05 * jax.random.normal(kw, (N, P), dtype=jnp.float32)  # table_w0
    table_b = 0.01 * jax.random.normal(kb, (N,), dtype=jnp.float32)    # table_b0

    y = deduce_forward(x, tgt, adapt_w, table_w, table_b)
    y = jax.block_until_ready(y)

    y_ref = _reference(x, adapt_w, table_w, table_b)
    assert y.shape == (B, S, N)
    # bf16 compute vs f32 reference -> loose tolerance
    assert jnp.allclose(y, y_ref, atol=2e-2, rtol=2e-2), (
        float(jnp.max(jnp.abs(y - y_ref))))

    # exercise the adapt_w=None (dim_embed == dim_hidden) single-matmul path
    table_w2 = 0.05 * jax.random.normal(kw, (N, H), dtype=jnp.float32)
    y2 = deduce_forward(x, tgt, None, table_w2, table_b)
    y2 = jax.block_until_ready(y2)
    y2_ref = _reference(x, None, table_w2, table_b)
    assert jnp.allclose(y2, y2_ref, atol=2e-2, rtol=2e-2), (
        float(jnp.max(jnp.abs(y2 - y2_ref))))

    print("KERNEL_OK")
</pallas_src>

<mosaic_0001>
module attributes {stable_mosaic.version = 11 : i64} {
  func.func @_adapt_kernel(%arg0: i32, %arg1: i32, %arg2: memref<16x32xbf16, #tpu.memory_space<vmem>>, %arg3: memref<32x16xbf16, #tpu.memory_space<vmem>>, %arg4: memref<16x16xbf16, #tpu.memory_space<vmem>>) attributes {dimension_semantics = [#tpu.dimension_semantics<parallel>, #tpu.dimension_semantics<parallel>], iteration_bounds = array<i64: 1, 1>, scalar_prefetch = 0 : i64, scratch_operands = 0 : i64, tpu.core_type = #tpu.core_type<tc>, window_params = [{transform_indices = @transform_0, window_bounds = array<i64: 16, 32>}, {transform_indices = @transform_1, window_bounds = array<i64: 32, 16>}, {transform_indices = @transform_2, window_bounds = array<i64: 16, 16>}]} {
    %c0 = arith.constant 0 : index
    %c0_0 = arith.constant 0 : index
    %0 = vector.load %arg2[%c0, %c0_0] : memref<16x32xbf16, #tpu.memory_space<vmem>>, vector<16x32xbf16>
    %c0_1 = arith.constant 0 : index
    %c0_2 = arith.constant 0 : index
    %1 = vector.load %arg3[%c0_1, %c0_2] : memref<32x16xbf16, #tpu.memory_space<vmem>>, vector<32x16xbf16>
    %cst = arith.constant dense<0.000000e+00> : vector<16x16xf32>
    %2 = tpu.matmul %0, %1, %cst {dimension_numbers = #tpu.dot_dimension_numbers<[1], [0], [0], [1], [0, 0, 1, 1], [], []>} : vector<16x32xbf16>, vector<32x16xbf16>, vector<16x16xf32> -> vector<16x16xf32>
    %3 = arith.truncf %2 : vector<16x16xf32> to vector<16x16xbf16>
    %c0_3 = arith.constant 0 : index
    %c0_4 = arith.constant 0 : index
    %4 = vector.load %arg4[%c0_3, %c0_4] : memref<16x16xbf16, #tpu.memory_space<vmem>>, vector<16x16xbf16>
    tpu.vector_store %arg4[%c0_3, %c0_4], %3 {strides = array<i32>} : memref<16x16xbf16, #tpu.memory_space<vmem>>, vector<16x16xbf16>,
    return
  }
  func.func @transform_0(%arg0: i32, %arg1: i32) -> (i32, i32) {
    %c0_i32 = arith.constant 0 : i32
    %c0_i32_0 = arith.constant 0 : i32
    return %arg0, %c0_i32 : i32, i32
  }
  func.func @transform_1(%arg0: i32, %arg1: i32) -> (i32, i32) {
    %c0_i32 = arith.constant 0 : i32
    %c0_i32_0 = arith.constant 0 : i32
    return %c0_i32, %arg1 : i32, i32
  }
  func.func @transform_2(%arg0: i32, %arg1: i32) -> (i32, i32) {
    %c0_i32 = arith.constant 0 : i32
    return %arg0, %arg1 : i32, i32
  }
}

</mosaic_0001>

<llo_original>
// kernel: tpu_custom_call.1
$region0: #{tpu_custom_call.1}
  #allocation0 [shape = 'u32[]', space=smem, size = 0x4, offset = 0x4, fixed_abs, tag = 'smem constant byte address 0x4 - core index']
  #allocation1 [shape = 'u32[144,128]{1,0:T(1,128)}', space=vmem, size = 0x12000, scoped, tag = 'internal scratch']
  %s0 = inlined_call_operand.vmem [shape: bf16[16,32], index: 0, kind: input, shape index: {}]
  %s1 = inlined_call_operand.vmem [shape: bf16[32,16], index: 1, kind: input, shape index: {}]
  %s2 = inlined_call_operand.hbm [shape: bf16[16,16], index: 2, kind: output, shape index: {}]
  %s3 = sld [smem:[#allocation0]]
  $region18: #{tpu_custom_call.1} parent=0
    _
  %s5 = ssub.s32 1, %s3
  %s6 = scalar_select 0, %s5, %s3
  $region1: #{tpu_custom_call.1} parent=0
    #allocation2 [shape = 'u8[4096]{0}', space=vmem, size = 0x1000, scoped, tag = 'output window, operand 0, single buffered']
    #allocation3 [shape = 's32[1]{0}', space=sflag, size = 0x4, scoped, tag = 'scoped memory for tpu_custom_call.1']
    %7 = vsyncpa [#allocation3], 0
    // Predicated region
    $region2: #{tpu_custom_call.1} parent=1 // pred_check
      _
    $region3: #{tpu_custom_call.1} parent=1 // pred_check_branch
      %9 = sbr.rel (0) target = $region5
    $region4: #{tpu_custom_call.1} parent=1 // pred_region
      _
    $region5: #{tpu_custom_call.1} parent=1 // pred_fallthru
      _
    // Predicated region
    $region6: #{tpu_custom_call.1} parent=1 // pred_check
      _
    $region7: #{tpu_custom_call.1} parent=1 // pred_check_branch
      %11 = sbr.rel (0) target = $region9
    $region8: #{tpu_custom_call.1} parent=1 // pred_region
      _
    $region9: #{tpu_custom_call.1} parent=1 // pred_fallthru
      _
    %v13 = vld [vmem:[%s0] sm:$0xf]
    %v14 = vld [vmem:[%s0 + $0x4] sm:$0xf]
    %v15 = vld [vmem:[%s1] sm:$0xf]
    %v16 = vld [vmem:[%s1 + $0x4] sm:$0xf]
    %v17 = vld [vmem:[%s1 + $0x8] sm:$0xf]
    %v18 = vld [vmem:[%s1 + $0xc] sm:$0xf]
    %v21 = vunpack.c.l.b16 %v13
    %v22 = vunpack.c.l.b16 %v14
    %v23 = vpack.c.b16 %v22, %v21
    %v28 = vunpack.c.l.b16 %v15
    %v29 = vunpack.c.l.b16 %v16
    %v30 = vunpack.c.l.b16 %v17
    %v31 = vunpack.c.l.b16 %v18
    %v32 = vpack.c.b16 %v29, %v28
    %v33 = vpack.c.b16 %v31, %v30
    %vm36 = vcmask 261120
    %v38 = vsel %vm36, %v23, 0
    %40 = vmatprep.subr.bf16.mxu0 0
    %41 = vmatpush1.bf16.msra.mxu0 %v32
    %42 = vmatprep.subr.bf16.mxu0 0
    %43 = vmatpush1.bf16.msra.mxu0 %v33
    %44 = vmatprep.subr.bf16.mxu0 0
    %45 = vmatpush1.bf16.msra.mxu0 0
    %46 = vmatprep.subr.bf16.mxu0 0
    %47 = vmatpush1.bf16.msra.mxu0 0
    %48 = vmatprep.subr.bf16.mxu0 0
    %49 = vmatpush1.bf16.msra.mxu0 0
    %50 = vmatprep.subr.bf16.mxu0 0
    %51 = vmatpush1.bf16.msra.mxu0 0
    %52 = vmatprep.subr.bf16.mxu0 0
    %53 = vmatpush1.bf16.msra.mxu0 0
    %54 = vmatprep.subr.bf16.mxu0 0
    %55 = vmatpush1.bf16.msra.mxu0 0
    %56 = vmatprep.subr.bf16.mxu0 0
    %57 = vmatpush1.bf16.msra.mxu0 0
    %58 = vmatprep.subr.bf16.mxu0 0
    %59 = vmatpush1.bf16.msra.mxu0 0
    %60 = vmatprep.subr.bf16.mxu0 0
    %61 = vmatpush1.bf16.msra.mxu0 0
    %62 = vmatprep.subr.bf16.mxu0 0
    %63 = vmatpush1.bf16.msra.mxu0 0
    %64 = vmatprep.subr.bf16.mxu0 0
    %65 = vmatpush1.bf16.msra.mxu0 0
    %66 = vmatprep.subr.bf16.mxu0 0
    %67 = vmatpush1.bf16.msra.mxu0 0
    %68 = vmatprep.subr.bf16.mxu0 0
    %69 = vmatpush1.bf16.msra.mxu0 0
    %70 = vmatprep.subr.bf16.mxu0 0
    %71 = vmatpush1.bf16.msra.mxu0 0
    %72 = vmatprep.mubr.bf16.mxu0 0
    %73 = vmatmul.mubr.bf16.gmra.mrb[0].mxu0 %v38
    %v74 = vpop.f32.mrb[0].mxu0
    %v75 = vadd.f32 0.0, %v74
    %v76 = vpop.f32.mrb[0].mxu0
    %v77 = vpop.f32.mrb[0].mxu0
    %v78 = vadd.f32 0.0, %v77
    %v79 = vpop.f32.mrb[0].mxu0
    %80 = vdwg.mxu0
    %v81 = vpack.c.bf16 %v78, %v75
    %v83 = vunpack.c.l.b16 %v81
    %v84 = vunpack.c.h.b16 %v81
    %v85 = vpack.c.b16 %v83, %v83
    %v86 = vpack.c.b16 %v84, %v84
    %vm89 = vcmask 125952
    %90 = vst.msk [vmem:[#allocation2] sm:$0xf] %vm89, %v85
    %91 = vst.msk [vmem:[#allocation2 + $0x4] sm:$0xf] %vm89, %v86
    // Predicated region
    $region10: #{tpu_custom_call.1} parent=1 // pred_check
      _
    $region11: #{tpu_custom_call.1} parent=1 // pred_check_branch
      %93 = sbr.rel (0) target = $region13
    $region12: #{tpu_custom_call.1} parent=1 // pred_region
      %s95 = ssub.s32 128, 128
      %96 = vsyncadd [#allocation3], %s95
      %s97 = sshll.u32 [#allocation2], 4
      %s98 = int_to_ptr.vmem [resolvable:$true] %s97
      %103 = dma.vmem_to_hbm [thread:$0]  %s98, 128, %s2, [#allocation3], 64, 64, 4
    $region13: #{tpu_custom_call.1} parent=1 // pred_fallthru
      _
    // Predicated region
    $region14: #{tpu_custom_call.1} parent=1 // pred_check
      _
    $region15: #{tpu_custom_call.1} parent=1 // pred_check_branch
      %105 = sbr.rel (0) target = $region17
    $region16: #{tpu_custom_call.1} parent=1 // pred_region
      %106 = dma.done [#allocation3], 128
    $region17: #{tpu_custom_call.1} parent=1 // pred_fallthru
      _
    %107 = vsyncpa [#allocation3], 1

</llo_original>
